<compile_context>
chip_gen: v5e
topology: v5e:2x2
jax: 0.10.0
libtpu: 0.0.40
codegen_flags: <defaults>
</compile_context>

<pallas_src>
import jax
import jax.numpy as jnp
from jax import lax
from jax.experimental import pallas as pl
from jax.experimental.pallas import tpu as pltpu


def _infer_qyz_kernel(x_ref, w_ref, b_ref, logits_ref, prob_ref):
    x = x_ref[...]                      # [TB, D]
    w = w_ref[...]                      # [D, K]  (pre-transposed at load time)
    b = b_ref[...]                      # [1, K]

    # MXU-native contraction: LHS[M,K] x RHS[K,N] -> no per-step weight transpose.
    logits = lax.dot_general(
        x, w, (((1,), (0,)), ((), ())),
        preferred_element_type=jnp.float32) + b            # [TB, K] f32

    # Numerically stable softmax over the K (lane) axis, all in f32.
    m = jnp.max(logits, axis=1, keepdims=True)              # [TB, 1]
    e = jnp.exp(logits - m)                                  # [TB, K]
    denom = jnp.sum(e, axis=1, keepdims=True)                # [TB, 1]
    prob = e * pl.reciprocal(denom, approx=False)            # exact: 1e-5 tolerance

    # Store both outputs back-to-back so the per-tile writeback DMAs batch.
    logits_ref[...] = logits.astype(logits_ref.dtype)
    prob_ref[...] = prob.astype(prob_ref.dtype)


def prepare_params(weight, bias):
    """One-time (model-load) prep.

    weight: [num_k, latent_dim] (PyTorch nn.Linear layout); bias: [num_k].
    Returns (w_t [latent_dim, num_k], b_row [1, num_k]) -- the MXU stationary
    layout, so the kernel needs no per-grid-step XLU transpose.
    """
    w_t = jnp.asarray(weight).T                  # [D, K]
    b_row = jnp.asarray(bias).reshape(1, -1)     # [1, K]
    return w_t, b_row


def _choose_tile_b(batch, d, k, vmem_budget_bytes=24 << 20):
    """Batch-tile sizing.

    * As large as a ~24 MiB VMEM budget allows (sized against v7x's 32 MiB
      scoped-VMEM default), counting double-buffered x / logits / prob tiles
      plus the resident weight & bias.
    * When the whole batch fits in one tile but can be split on 8-row
      granularity, use two tiles so the "parallel" batch axis feeds both
      TensorCores on v7x.
    """
    per_row = 2 * (d + 2 * k) * 4          # double-buffered x + logits + prob (f32)
    fixed = (k * d + k) * 4                # resident weight + bias (f32)
    max_tb = max(8, ((vmem_budget_bytes - fixed) // per_row) // 8 * 8)
    if batch <= 16:
        return batch                        # single tile; block == full batch dim
    if batch <= max_tb:
        # Fits in one tile: split in two (rounded to 8 rows) for v7x's 2nd TC.
        half = -(-batch // 2)
        return min(max_tb, ((half + 7) // 8) * 8)
    return max_tb


def inference_qyz(x, w_t, b_row):
    """x: [B, latent_dim]; (w_t, b_row) from prepare_params().

    Returns (logits [B, num_k], prob_cat [B, num_k]).
    """
    B, D = x.shape
    D2, K = w_t.shape
    assert D == D2 and b_row.shape == (1, K)

    TB = _choose_tile_b(B, D, K)
    grid = (pl.cdiv(B, TB),)

    logits, prob = pl.pallas_call(
        _infer_qyz_kernel,
        out_shape=(
            jax.ShapeDtypeStruct((B, K), jnp.float32),   # logits (unpadded K)
            jax.ShapeDtypeStruct((B, K), jnp.float32),   # prob_cat
        ),
        grid=grid,
        in_specs=[
            pl.BlockSpec((TB, D), lambda i: (i, 0)),     # x tiled over batch
            pl.BlockSpec((D, K), lambda i: (0, 0)),      # weight resident across tiles
            pl.BlockSpec((1, K), lambda i: (0, 0)),      # bias resident
        ],
        out_specs=(
            pl.BlockSpec((TB, K), lambda i: (i, 0)),
            pl.BlockSpec((TB, K), lambda i: (i, 0)),
        ),
        compiler_params=pltpu.CompilerParams(
            dimension_semantics=("parallel",),           # shards B across TCs on v7x
            vmem_limit_bytes=32 * 1024 * 1024,           # fits all of v5e/v6e/v7x
        ),
    )(x, w_t, b_row)

    return logits, prob


if __name__ == "__main__":
    # Module-consistent small shapes: batch=8, latent_dim=32, num_k=16
    B, latent_dim, num_k = 8, 32, 16

    key = jax.random.PRNGKey(0)
    kx, kw, kb = jax.random.split(key, 3)

    x = jax.random.normal(kx, (B, latent_dim), dtype=jnp.float32)
    bound = 1.0 / (latent_dim ** 0.5)   # mimic nn.Linear uniform init
    weight = jax.random.uniform(kw, (num_k, latent_dim), jnp.float32, -bound, bound)
    bias = jax.random.uniform(kb, (num_k,), jnp.float32, -bound, bound)

    # Parameter prep (transpose to [D, K]) happens once, outside the hot path.
    w_t, b_row = prepare_params(weight, bias)

    logits, prob = inference_qyz(x, w_t, b_row)
    logits = jax.block_until_ready(logits)
    prob = jax.block_until_ready(prob)

    ref_logits = x @ weight.T + bias
    ref_prob = jax.nn.softmax(ref_logits, axis=1)

    assert logits.shape == (B, num_k) and prob.shape == (B, num_k)
    assert jnp.allclose(logits, ref_logits, atol=1e-5, rtol=1e-5)
    assert jnp.allclose(prob, ref_prob, atol=1e-5, rtol=1e-5)
    assert jnp.allclose(jnp.sum(prob, axis=1), 1.0, atol=1e-5)

    print("KERNEL_OK")
</pallas_src>

<mosaic_0001>
module attributes {stable_mosaic.version = 11 : i64} {
  func.func @_infer_qyz_kernel(%arg0: i32, %arg1: memref<8x32xf32, #tpu.memory_space<vmem>>, %arg2: memref<32x16xf32, #tpu.memory_space<vmem>>, %arg3: memref<1x16xf32, #tpu.memory_space<vmem>>, %arg4: memref<8x16xf32, #tpu.memory_space<vmem>>, %arg5: memref<8x16xf32, #tpu.memory_space<vmem>>) attributes {dimension_semantics = [#tpu.dimension_semantics<parallel>], iteration_bounds = array<i64: 1>, scalar_prefetch = 0 : i64, scratch_operands = 0 : i64, tpu.core_type = #tpu.core_type<tc>, window_params = [{transform_indices = @transform_0, window_bounds = array<i64: 8, 32>}, {pipeline_mode = #tpu.pipeline_mode<synchronous>, transform_indices = @transform_1, window_bounds = array<i64: 32, 16>}, {pipeline_mode = #tpu.pipeline_mode<synchronous>, transform_indices = @transform_2, window_bounds = array<i64: 1, 16>}, {transform_indices = @transform_3, window_bounds = array<i64: 8, 16>}, {transform_indices = @transform_4, window_bounds = array<i64: 8, 16>}]} {
    %c0 = arith.constant 0 : index
    %c0_0 = arith.constant 0 : index
    %0 = vector.load %arg1[%c0, %c0_0] : memref<8x32xf32, #tpu.memory_space<vmem>>, vector<8x32xf32>
    %c0_1 = arith.constant 0 : index
    %c0_2 = arith.constant 0 : index
    %1 = vector.load %arg2[%c0_1, %c0_2] : memref<32x16xf32, #tpu.memory_space<vmem>>, vector<32x16xf32>
    %c0_3 = arith.constant 0 : index
    %c0_4 = arith.constant 0 : index
    %2 = vector.load %arg3[%c0_3, %c0_4] : memref<1x16xf32, #tpu.memory_space<vmem>>, vector<1x16xf32>
    %cst = arith.constant dense<0.000000e+00> : vector<8x16xf32>
    %3 = tpu.matmul %0, %1, %cst {dimension_numbers = #tpu.dot_dimension_numbers<[1], [0], [0], [1], [0, 0, 1, 1], [], []>} : vector<8x32xf32>, vector<32x16xf32>, vector<8x16xf32> -> vector<8x16xf32>
    %4 = vector.broadcast %2 : vector<1x16xf32> to vector<8x16xf32>
    %5 = arith.addf %3, %4 : vector<8x16xf32>
    %cst_5 = arith.constant dense<0xFF800000> : vector<8xf32>
    %6 = vector.multi_reduction <maximumf>, %5, %cst_5 [1] : vector<8x16xf32> to vector<8xf32>
    %7 = vector.shape_cast %6 : vector<8xf32> to vector<8x1xf32>
    %8 = vector.broadcast %7 : vector<8x1xf32> to vector<8x16xf32>
    %9 = arith.subf %5, %8 : vector<8x16xf32>
    %10 = math.exp %9 : vector<8x16xf32>
    %cst_6 = arith.constant dense<0.000000e+00> : vector<8xf32>
    %11 = vector.multi_reduction <add>, %10, %cst_6 [1] : vector<8x16xf32> to vector<8xf32>
    %12 = vector.shape_cast %11 : vector<8xf32> to vector<8x1xf32>
    %13 = tpu.reciprocal %12 : vector<8x1xf32> -> vector<8x1xf32>
    %14 = vector.broadcast %13 : vector<8x1xf32> to vector<8x16xf32>
    %15 = arith.mulf %10, %14 : vector<8x16xf32>
    %c0_7 = arith.constant 0 : index
    %c0_8 = arith.constant 0 : index
    %16 = vector.load %arg4[%c0_7, %c0_8] : memref<8x16xf32, #tpu.memory_space<vmem>>, vector<8x16xf32>
    tpu.vector_store %arg4[%c0_7, %c0_8], %5 {strides = array<i32>} : memref<8x16xf32, #tpu.memory_space<vmem>>, vector<8x16xf32>,
    %c0_9 = arith.constant 0 : index
    %c0_10 = arith.constant 0 : index
    %17 = vector.load %arg5[%c0_9, %c0_10] : memref<8x16xf32, #tpu.memory_space<vmem>>, vector<8x16xf32>
    tpu.vector_store %arg5[%c0_9, %c0_10], %15 {strides = array<i32>} : memref<8x16xf32, #tpu.memory_space<vmem>>, vector<8x16xf32>,
    return
  }
  func.func @transform_0(%arg0: i32) -> (i32, i32) {
    %c0_i32 = arith.constant 0 : i32
    %c0_i32_0 = arith.constant 0 : i32
    return %arg0, %c0_i32 : i32, i32
  }
  func.func @transform_1(%arg0: i32) -> (i32, i32) {
    %c0_i32 = arith.constant 0 : i32
    %c0_i32_0 = arith.constant 0 : i32
    %c0_i32_1 = arith.constant 0 : i32
    return %c0_i32, %c0_i32_0 : i32, i32
  }
  func.func @transform_2(%arg0: i32) -> (i32, i32) {
    %c0_i32 = arith.constant 0 : i32
    %c0_i32_0 = arith.constant 0 : i32
    %c0_i32_1 = arith.constant 0 : i32
    return %c0_i32, %c0_i32_0 : i32, i32
  }
  func.func @transform_3(%arg0: i32) -> (i32, i32) {
    %c0_i32 = arith.constant 0 : i32
    %c0_i32_0 = arith.constant 0 : i32
    return %arg0, %c0_i32 : i32, i32
  }
  func.func @transform_4(%arg0: i32) -> (i32, i32) {
    %c0_i32 = arith.constant 0 : i32
    %c0_i32_0 = arith.constant 0 : i32
    return %arg0, %c0_i32 : i32, i32
  }
}

</mosaic_0001>

<llo_original>
// kernel: tpu_custom_call.1
$region0: #{tpu_custom_call.1}
  #allocation0 [shape = 'u32[]', space=smem, size = 0x4, offset = 0x4, fixed_abs, tag = 'smem constant byte address 0x4 - core index']
  #allocation1 [shape = 'u32[72,128]{1,0:T(1,128)}', space=vmem, size = 0x9000, scoped, tag = 'internal scratch']
  %s0 = inlined_call_operand.vmem [shape: f32[8,32], index: 0, kind: input, shape index: {}]
  %s1 = inlined_call_operand.vmem [shape: f32[32,16], index: 1, kind: input, shape index: {}]
  %s2 = inlined_call_operand.vmem [shape: f32[1,16], index: 2, kind: input, shape index: {}]
  %s3 = inlined_call_operand.hbm [shape: f32[8,16], index: 3, kind: output, shape index: {0}]
  %s4 = inlined_call_operand.hbm [shape: f32[8,16], index: 4, kind: output, shape index: {1}]
  %5 = xla_tuple %s3, %s4
  %s6 = sld [smem:[#allocation0]]
  $region30: #{tpu_custom_call.1} parent=0
    _
  %s8 = ssub.s32 1, %s6
  %s9 = scalar_select 0, %s8, %s6
  $region1: #{tpu_custom_call.1} parent=0
    #allocation2 [shape = 'u8[4096]{0}', space=vmem, size = 0x1000, scoped, tag = 'output window, operand 0, single buffered']
    #allocation3 [shape = 's32[1]{0}', space=sflag, size = 0x4, scoped, tag = 'scoped memory for tpu_custom_call.1']
    #allocation4 [shape = 'u8[4096]{0}', space=vmem, size = 0x1000, scoped, tag = 'output window, operand 1, single buffered']
    #allocation5 [shape = 's32[1]{0}', space=sflag, size = 0x4, scoped, tag = 'scoped memory for tpu_custom_call.1']
    %10 = vsyncpa [#allocation3], 0
    %11 = vsyncpa [#allocation5], 0
    // Predicated region
    $region2: #{tpu_custom_call.1} parent=1 // pred_check
      _
    $region3: #{tpu_custom_call.1} parent=1 // pred_check_branch
      %13 = sbr.rel (0) target = $region5
    $region4: #{tpu_custom_call.1} parent=1 // pred_region
      _
    $region5: #{tpu_custom_call.1} parent=1 // pred_fallthru
      _
    // Predicated region
    $region6: #{tpu_custom_call.1} parent=1 // pred_check
      _
    $region7: #{tpu_custom_call.1} parent=1 // pred_check_branch
      %15 = sbr.rel (0) target = $region9
    $region8: #{tpu_custom_call.1} parent=1 // pred_region
      _
    $region9: #{tpu_custom_call.1} parent=1 // pred_fallthru
      _
    // Predicated region
    $region10: #{tpu_custom_call.1} parent=1 // pred_check
      _
    $region11: #{tpu_custom_call.1} parent=1 // pred_check_branch
      %17 = sbr.rel (0) target = $region13
    $region12: #{tpu_custom_call.1} parent=1 // pred_region
      _
    $region13: #{tpu_custom_call.1} parent=1 // pred_fallthru
      _
    %v18 = vld [vmem:[%s0] sm:$0xff]
    %v19 = vld [vmem:[%s1] sm:$0xff]
    %v20 = vld [vmem:[%s1 + $0x8] sm:$0xff]
    %v21 = vld [vmem:[%s1 + $0x10] sm:$0xff]
    %v22 = vld [vmem:[%s1 + $0x18] sm:$0xff]
    %v23 = vld [vmem:[%s2] sm:$0x1]
    %v25 = vperm.slane %v23, 0
    %vm27 = vcmask 261120
    %v29 = vsel %vm27, %v18, 0
    %31 = vmatpush.msra.mxu0 0.0
    %32 = vmatpush.msra.mxu0 0.0
    %33 = vmatpush.msra.mxu0 0.0
    %34 = vmatpush.msra.mxu0 0.0
    %35 = vmatpush.msra.mxu0 0.0
    %36 = vmatpush.msra.mxu0 0.0
    %37 = vmatpush.msra.mxu0 0.0
    %38 = vmatpush.msra.mxu0 0.0
    %39 = vmatpush.msra.mxu0 0.0
    %40 = vmatpush.msra.mxu0 0.0
    %41 = vmatpush.msra.mxu0 0.0
    %42 = vmatpush.msra.mxu0 0.0
    %43 = vmatpush.msra.mxu0 %v22
    %44 = vmatpush.msra.mxu0 %v21
    %45 = vmatpush.msra.mxu0 %v20
    %46 = vmatpush.msra.mxu0 %v19
    %47 = vmatmul.f32.gmra.mxu0 %v29
    %v48 = vpop.f32.mrf.mxu0
    %v49 = vadd.f32 %v25, %v48
    %50 = vdwg.mxu0
    %vm51 = vcmask 130048
    %v52 = vsel %vm51, %v49, -inf
    %53 = vmax.xlane.f32.xlu0 %v52
    %v54 = vpop.xlane.xlu0 %53
    %v55 = vsub.f32 %v49, %v54
    %v56 = vmul.f32 %v55, 1.442695
    %v57 = vpow.pop %v56
    %v58 = vsel %vm51, %v57, 0.0
    %59 = vadd.xlane.f32.xlu0 %v58
    %v60 = vpop.xlane.xlu0 %59
    %v61 = vrcp.pop %v60
    %v62 = vmul.f32 %v60, %v61
    %v63 = vsub.f32 1.0, %v62
    %v64 = vmul.f32 %v61, %v63
    %v65 = vadd.f32 %v61, %v64
    %vm66 = vweird.f32 %v60
    %vm67 = vweird.f32 %v61
    %vm68 = vmor %vm66, %vm67
    %v69 = vsel %vm68, %v61, %v65
    %v70 = vand.u32 2147483647, %v60
    %vm71 = vcmp.eq.f32.partialorder %v70, 8.507059e+37
    %v72 = vand.u32 %v60, 2147483648
    %v73 = vor.u32 1.1754944e-38, %v72
    %v74 = vsel %vm71, %v73, %v69
    %v75 = vmul.f32 %v57, %v74
    %76 = vst.msk [vmem:[#allocation2] sm:$0xff] %vm51, %v49
    %77 = vst.msk [vmem:[#allocation4] sm:$0xff] %vm51, %v75
    // Predicated region
    $region14: #{tpu_custom_call.1} parent=1 // pred_check
      _
    $region15: #{tpu_custom_call.1} parent=1 // pred_check_branch
      %79 = sbr.rel (0) target = $region17
    $region16: #{tpu_custom_call.1} parent=1 // pred_region
      %81 = vsyncadd [#allocation3], 0
      %s83 = sshll.u32 [#allocation2], 4
      %s84 = int_to_ptr.vmem [resolvable:$true] %s83
      %s85 = sshll.u32 %s3, 4
      %s86 = int_to_ptr.hbm [resolvable:$true] %s85
      %88 = dma.vmem_to_hbm [thread:$0]  %s84, 128, %s86, [#allocation3]
    $region17: #{tpu_custom_call.1} parent=1 // pred_fallthru
      _
    // Predicated region
    $region18: #{tpu_custom_call.1} parent=1 // pred_check
      _
    $region19: #{tpu_custom_call.1} parent=1 // pred_check_branch
      %90 = sbr.rel (0) target = $region21
    $region20: #{tpu_custom_call.1} parent=1 // pred_region
      %92 = vsyncadd [#allocation5], 0
      %s94 = sshll.u32 [#allocation4], 4
      %s95 = int_to_ptr.vmem [resolvable:$true] %s94
      %s96 = sshll.u32 %s4, 4
      %s97 = int_to_ptr.hbm [resolvable:$true] %s96
      %99 = dma.vmem_to_hbm [thread:$0]  %s95, 128, %s97, [#allocation5]
    $region21: #{tpu_custom_call.1} parent=1 // pred_fallthru
      _
    // Predicated region
    $region22: #{tpu_custom_call.1} parent=1 // pred_check
      _
    $region23: #{tpu_custom_call.1} parent=1 // pred_check_branch
      %101 = sbr.rel (0) target = $region25
    $region24: #{tpu_custom_call.1} parent=1 // pred_region
      %103 = dma.done [#allocation3], 128
    $region25: #{tpu_custom_call.1} parent=1 // pred_fallthru
      _
    // Predicated region
    $region26: #{tpu_custom_call.1} parent=1 // pred_check
      _
    $region27: #{tpu_custom_call.1} parent=1 // pred_check_branch
      %105 = sbr.rel (0) target = $region29
    $region28: #{tpu_custom_call.1} parent=1 // pred_region
      %107 = dma.done [#allocation5], 128
    $region29: #{tpu_custom_call.1} parent=1 // pred_fallthru
      _
    %108 = vsyncpa [#allocation3], 1
    %109 = vsyncpa [#allocation5], 1

</llo_original>
